<compile_context>
chip_gen: v6e
topology: v6e:2x2x1
jax: 0.10.0
libtpu: 0.0.40
codegen_flags: <defaults>
</compile_context>

<pallas_src>
import functools
import math

import jax
import jax.numpy as jnp
from jax import lax
from jax.experimental import pallas as pl
from jax.experimental.pallas import tpu as pltpu


def _round_up(x, n):
    return ((x + n - 1) // n) * n


def _pick_tiles(B, C, D, *, tb_max=256, tc_max=2048, tk_max=2048,
                budget_bytes=40 * 1024 * 1024):
    """Pick (TB, TC, TK) against an explicit VMEM budget (v7x-safe)."""
    TB = min(tb_max, _round_up(B, 16))       # multiple of 16 (bf16 sublanes)
    TC = min(tc_max, _round_up(C, 128))      # lane-dense output tile
    TK = D if D <= tk_max else tk_max        # full-D tile when it fits

    def vmem_bytes(tb_, tc_, tk_):
        x_b = 2 * tb_ * tk_ * 2              # bf16 x tile, double buffered
        w_b = 2 * tk_ * tc_ * 2              # bf16 weight^T tile, double buffered
        o_b = 2 * tb_ * tc_ * 4              # f32 out tile, double buffered
        a_b = tb_ * tc_ * 4                  # f32 accumulator scratch
        return x_b + w_b + o_b + a_b

    while vmem_bytes(TB, TC, TK) > budget_bytes and TC > 128:
        TC = max(128, (TC // 2 // 128) * 128)
    while vmem_bytes(TB, TC, TK) > budget_bytes and TK > 512 and TK < D:
        TK = max(512, (TK // 2 // 128) * 128)
    while vmem_bytes(TB, TC, TK) > budget_bytes and TB > 16:
        TB = max(16, (TB // 2 // 16) * 16)
    return TB, TC, TK


def _cosface_kernel(lbl_ref, x_ref, wt_ref, o_ref, acc_ref, *, sm, tc):
    """One (TB, TC) output tile of s*cos(theta) - s*m*one_hot, K-tiled."""
    j = pl.program_id(0)        # class tile (outer -> weight resident over batch)
    k = pl.program_id(2)        # reduction tile (innermost, "arbitrary")

    @pl.when(k == 0)
    def _():
        acc_ref[...] = jnp.zeros_like(acc_ref)

    # bf16 x (already scaled by s/||x||) @ bf16 unit-norm weight^T, f32 acc.
    acc_ref[...] += jnp.dot(x_ref[...], wt_ref[...],
                            preferred_element_type=jnp.float32)

    @pl.when(k == pl.num_programs(2) - 1)
    def _():
        tb, tcc = acc_ref.shape
        # One-hot margin with *global* column ids (class axis is tiled).
        col = j * tc + lax.broadcasted_iota(jnp.int32, (tb, tcc), 1)
        one_hot = col == lbl_ref[...]                    # (TB,1) -> (TB,TC)
        out = acc_ref[...]
        o_ref[...] = jnp.where(one_hot, out - sm, out).astype(o_ref.dtype)


def prepare_cosface_weight(weight):
    """weight (C, D) f32 -> row-normalized, transposed, bf16 (D, C).

    Cache the result across forward calls (it only changes when the weight
    does); this avoids re-paying the full-weight transpose + cast per call.
    """
    w_norm = jnp.maximum(jnp.linalg.norm(weight, axis=-1, keepdims=True), 1e-12)
    return jnp.transpose(weight / w_norm).astype(jnp.bfloat16)   # (D, C)


def cosface_forward(x, wt_hat, label, *, s=64.0, m=0.35,
                    tb_max=256, tc_max=2048, tk_max=2048):
    """x: (B, D) f32, wt_hat: (D, C) bf16 unit-norm columns, label: (B,) int."""
    B, D = x.shape
    D2, C = wt_hat.shape
    assert D == D2

    TB, TC, TK = _pick_tiles(B, C, D, tb_max=tb_max, tc_max=tc_max, tk_max=tk_max)
    Bp = _round_up(B, TB)
    Cp = _round_up(C, TC)
    Dp = _round_up(D, TK)

    # Fold the normalization and the s scale into x once, in f32, then cast.
    x_norm = jnp.maximum(jnp.linalg.norm(x, axis=-1, keepdims=True), 1e-12)
    x_hat = (x * (s / x_norm)).astype(jnp.bfloat16)              # (B, D)

    # Zero padding is safe: padded D columns contribute 0 to the dot, padded
    # batch rows / class columns are sliced off below.  NOTE: padded batch
    # rows inherit label 0 from jnp.pad and will take the margin branch for
    # class 0 -- harmless because those rows never escape this function.
    x_p = jnp.pad(x_hat, ((0, Bp - B), (0, Dp - D))) if (Bp != B or Dp != D) else x_hat
    wt_p = jnp.pad(wt_hat, ((0, Dp - D), (0, Cp - C))) if (Dp != D or Cp != C) else wt_hat
    lbl = label.astype(jnp.int32).reshape(-1, 1)
    lbl_p = jnp.pad(lbl, ((0, Bp - B), (0, 0))) if Bp != B else lbl

    grid = (Cp // TC, Bp // TB, Dp // TK)   # class outer, batch, reduction inner
    kernel = functools.partial(_cosface_kernel, sm=s * m, tc=TC)

    out = pl.pallas_call(
        kernel,
        out_shape=jax.ShapeDtypeStruct((Bp, Cp), jnp.float32),
        grid_spec=pltpu.PrefetchScalarGridSpec(
            num_scalar_prefetch=0,
            grid=grid,
            in_specs=[
                pl.BlockSpec((TB, 1), lambda j, i, k: (i, 0)),    # label
                pl.BlockSpec((TB, TK), lambda j, i, k: (i, k)),   # x_hat (bf16)
                pl.BlockSpec((TK, TC), lambda j, i, k: (k, j)),   # weight^T (bf16)
            ],
            out_specs=pl.BlockSpec((TB, TC), lambda j, i, k: (i, j)),
            scratch_shapes=[pltpu.VMEM((TB, TC), jnp.float32)],   # f32 accumulator
        ),
        compiler_params=pltpu.CompilerParams(
            dimension_semantics=("parallel", "parallel", "arbitrary"),
            vmem_limit_bytes=48 * 1024 * 1024,   # above v5e/v6e/v7x scoped defaults
        ),
    )(lbl_p, x_p, wt_p)

    return out[:B, :C]


def _xavier_uniform(key, shape):
    # matches nn.init.xavier_uniform_ for a 2D (out_features, in_features) tensor
    fan_out, fan_in = shape
    bound = math.sqrt(6.0 / (fan_in + fan_out))
    return jax.random.uniform(key, shape, jnp.float32, -bound, bound)


if __name__ == "__main__":
    key = jax.random.PRNGKey(0)
    k_x, k_w, k_l = jax.random.split(key, 3)

    B = 8      # batch
    D = 32     # in_features
    C = 128    # out_features (number of classes)

    x = jax.random.normal(k_x, (B, D), jnp.float32)
    weight = _xavier_uniform(k_w, (C, D))
    label = jax.random.randint(k_l, (B,), 0, C, jnp.int32)

    wt_hat = prepare_cosface_weight(weight)   # cache across calls in real use
    out = cosface_forward(x, wt_hat, label, s=64.0, m=0.35)
    out = jax.block_until_ready(out)

    # Reference check (plain f32 JAX).  MXU operands are bf16 (pre-normalized,
    # so bounded by s), hence the loose tolerance on outputs scaled by s=64.
    x_n = x / jnp.maximum(jnp.linalg.norm(x, axis=-1, keepdims=True), 1e-12)
    w_n = weight / jnp.maximum(jnp.linalg.norm(weight, axis=-1, keepdims=True), 1e-12)
    cos = x_n @ w_n.T
    one_hot = jax.nn.one_hot(label, C, dtype=jnp.float32)
    ref = (one_hot * (cos - 0.35) + (1.0 - one_hot) * cos) * 64.0
    assert out.shape == ref.shape
    assert jnp.allclose(out, ref, atol=0.5, rtol=1e-2), "mismatch vs reference"

    print("KERNEL_OK")
</pallas_src>

<mosaic_0001>
module attributes {stable_mosaic.version = 11 : i64} {
  func.func @_cosface_kernel(%arg0: i32, %arg1: i32, %arg2: i32, %arg3: memref<16x1xi32, #tpu.memory_space<vmem>>, %arg4: memref<16x32xbf16, #tpu.memory_space<vmem>>, %arg5: memref<32x128xbf16, #tpu.memory_space<vmem>>, %arg6: memref<16x128xf32, #tpu.memory_space<vmem>>, %arg7: memref<16x128xf32, #tpu.memory_space<vmem>>) attributes {dimension_semantics = [#tpu.dimension_semantics<parallel>, #tpu.dimension_semantics<parallel>, #tpu.dimension_semantics<arbitrary>], iteration_bounds = array<i64: 1, 1, 1>, scalar_prefetch = 0 : i64, scratch_operands = 1 : i64, tpu.core_type = #tpu.core_type<tc>, window_params = [{transform_indices = @transform_0, window_bounds = array<i64: 16, 1>}, {transform_indices = @transform_1, window_bounds = array<i64: 16, 32>}, {transform_indices = @transform_2, window_bounds = array<i64: 32, 128>}, {transform_indices = @transform_3, window_bounds = array<i64: 16, 128>}]} {
    %c0_i32 = arith.constant 0 : i32
    %0 = arith.cmpi eq, %arg2, %c0_i32 : i32
    %1 = arith.extui %0 : i1 to i32
    %c0_i32_0 = arith.constant 0 : i32
    %2 = arith.cmpi ne, %1, %c0_i32_0 : i32
    scf.if %2 {
      %cst_10 = arith.constant 0.000000e+00 : f32
      %12 = vector.broadcast %cst_10 : f32 to vector<16x128xf32>
      %c0_11 = arith.constant 0 : index
      %c0_12 = arith.constant 0 : index
      %13 = vector.load %arg7[%c0_11, %c0_12] : memref<16x128xf32, #tpu.memory_space<vmem>>, vector<16x128xf32>
      tpu.vector_store %arg7[%c0_11, %c0_12], %12 {strides = array<i32>} : memref<16x128xf32, #tpu.memory_space<vmem>>, vector<16x128xf32>,
    } else {
    }
    %c0 = arith.constant 0 : index
    %c0_1 = arith.constant 0 : index
    %3 = vector.load %arg7[%c0, %c0_1] : memref<16x128xf32, #tpu.memory_space<vmem>>, vector<16x128xf32>
    %c0_2 = arith.constant 0 : index
    %c0_3 = arith.constant 0 : index
    %4 = vector.load %arg4[%c0_2, %c0_3] : memref<16x32xbf16, #tpu.memory_space<vmem>>, vector<16x32xbf16>
    %c0_4 = arith.constant 0 : index
    %c0_5 = arith.constant 0 : index
    %5 = vector.load %arg5[%c0_4, %c0_5] : memref<32x128xbf16, #tpu.memory_space<vmem>>, vector<32x128xbf16>
    %cst = arith.constant dense<0.000000e+00> : vector<16x128xf32>
    %6 = tpu.matmul %4, %5, %cst {dimension_numbers = #tpu.dot_dimension_numbers<[1], [0], [0], [1], [0, 0, 1, 1], [], []>} : vector<16x32xbf16>, vector<32x128xbf16>, vector<16x128xf32> -> vector<16x128xf32>
    %7 = arith.addf %3, %6 : vector<16x128xf32>
    %c0_6 = arith.constant 0 : index
    %c0_7 = arith.constant 0 : index
    %8 = vector.load %arg7[%c0_6, %c0_7] : memref<16x128xf32, #tpu.memory_space<vmem>>, vector<16x128xf32>
    tpu.vector_store %arg7[%c0_6, %c0_7], %7 {strides = array<i32>} : memref<16x128xf32, #tpu.memory_space<vmem>>, vector<16x128xf32>,
    %c0_i32_8 = arith.constant 0 : i32
    %9 = arith.cmpi eq, %arg2, %c0_i32_8 : i32
    %10 = arith.extui %9 : i1 to i32
    %c0_i32_9 = arith.constant 0 : i32
    %11 = arith.cmpi ne, %10, %c0_i32_9 : i32
    scf.if %11 {
      %c128_i32 = arith.constant 128 : i32
      %12 = arith.muli %arg0, %c128_i32 : i32
      %13 = tpu.iota {dimensions = array<i32: 1>} : vector<16x128xi32>
      %14 = vector.broadcast %12 : i32 to vector<16x128xi32>
      %15 = arith.addi %14, %13 : vector<16x128xi32>
      %c0_10 = arith.constant 0 : index
      %c0_11 = arith.constant 0 : index
      %16 = vector.load %arg3[%c0_10, %c0_11] : memref<16x1xi32, #tpu.memory_space<vmem>>, vector<16x1xi32>
      %17 = vector.broadcast %16 : vector<16x1xi32> to vector<16x128xi32>
      %18 = arith.cmpi eq, %15, %17 : vector<16x128xi32>
      %c0_12 = arith.constant 0 : index
      %c0_13 = arith.constant 0 : index
      %19 = vector.load %arg7[%c0_12, %c0_13] : memref<16x128xf32, #tpu.memory_space<vmem>>, vector<16x128xf32>
      %cst_14 = arith.constant 2.240000e+01 : f32
      %20 = vector.broadcast %cst_14 : f32 to vector<16x128xf32>
      %21 = arith.subf %19, %20 : vector<16x128xf32>
      %22 = arith.select %18, %21, %19 : vector<16x128xi1>, vector<16x128xf32>
      %c0_15 = arith.constant 0 : index
      %c0_16 = arith.constant 0 : index
      %23 = vector.load %arg6[%c0_15, %c0_16] : memref<16x128xf32, #tpu.memory_space<vmem>>, vector<16x128xf32>
      tpu.vector_store %arg6[%c0_15, %c0_16], %22 {strides = array<i32>} : memref<16x128xf32, #tpu.memory_space<vmem>>, vector<16x128xf32>,
    } else {
    }
    return
  }
  func.func @transform_0(%arg0: i32, %arg1: i32, %arg2: i32) -> (i32, i32) {
    %c0_i32 = arith.constant 0 : i32
    %c0_i32_0 = arith.constant 0 : i32
    return %arg1, %c0_i32 : i32, i32
  }
  func.func @transform_1(%arg0: i32, %arg1: i32, %arg2: i32) -> (i32, i32) {
    %c0_i32 = arith.constant 0 : i32
    return %arg1, %arg2 : i32, i32
  }
  func.func @transform_2(%arg0: i32, %arg1: i32, %arg2: i32) -> (i32, i32) {
    %c0_i32 = arith.constant 0 : i32
    return %arg2, %arg0 : i32, i32
  }
  func.func @transform_3(%arg0: i32, %arg1: i32, %arg2: i32) -> (i32, i32) {
    %c0_i32 = arith.constant 0 : i32
    return %arg1, %arg0 : i32, i32
  }
}

</mosaic_0001>

<llo_original>
// kernel: tpu_custom_call.1
$region0: #{tpu_custom_call.1}
  #allocation0 [shape = 'u32[]', space=smem, size = 0x4, offset = 0x4, fixed_abs, tag = 'smem constant byte address 0x4 - core index']
  #allocation1 [shape = 'u32[144,128]{1,0:T(1,128)}', space=vmem, size = 0x12000, scoped, tag = 'internal scratch']
  #allocation2 [shape = 'f32[16,128]{1,0:T(8,128)}', space=vmem, size = 0x2000, scoped, tag = 'scratch operand']
  %s0 = inlined_call_operand.vmem [shape: s32[16,1], index: 0, kind: input, shape index: {}]
  %s1 = inlined_call_operand.hbm [shape: bf16[16,32], index: 1, kind: input, shape index: {}]
  %s2 = inlined_call_operand.vmem [shape: bf16[32,128], index: 2, kind: input, shape index: {}]
  %s3 = inlined_call_operand.hbm [shape: f32[16,128], index: 3, kind: output, shape index: {}]
  %s4 = sld [smem:[#allocation0]]
  $region34: #{tpu_custom_call.1} parent=0
    _
  %s6 = ssub.s32 1, %s4
  %s7 = scalar_select 0, %s6, %s4
  $region1: #{tpu_custom_call.1} parent=0
    #allocation3 [shape = 'u8[4096]{0}', space=vmem, size = 0x1000, scoped, tag = 'input window, operand 1, single buffered']
    #allocation4 [shape = 's32[1]{0}', space=sflag, size = 0x4, scoped, tag = 'scoped memory for tpu_custom_call.1']
    #allocation5 [shape = 's32[1]{0}', space=sflag, size = 0x4, scoped, tag = 'scoped memory for tpu_custom_call.1']
    #allocation6 [shape = 'u8[8192]{0}', space=vmem, size = 0x2000, scoped, tag = 'output window, operand 0, single buffered']
    %8 = vsyncpa [#allocation4], 0
    %9 = vsyncpa [#allocation5], 0
    // Predicated region
    $region2: #{tpu_custom_call.1} parent=1 // pred_check
      _
    $region3: #{tpu_custom_call.1} parent=1 // pred_check_branch
      %11 = sbr.rel (0) target = $region5
    $region4: #{tpu_custom_call.1} parent=1 // pred_region
      _
    $region5: #{tpu_custom_call.1} parent=1 // pred_fallthru
      _
    // Predicated region
    $region6: #{tpu_custom_call.1} parent=1 // pred_check
      _
    $region7: #{tpu_custom_call.1} parent=1 // pred_check_branch
      %13 = sbr.rel (0) target = $region9
    $region8: #{tpu_custom_call.1} parent=1 // pred_region
      %s15 = ssub.s32 128, 128
      %16 = vsyncadd [#allocation4], %s15
      %s17 = sshll.u32 [#allocation3], 4
      %s18 = int_to_ptr.vmem [resolvable:$true] %s17
      %23 = dma.hbm_to_vmem [thread:$0]  %s1, 128, %s18, [#allocation4], 64, 64, 4
    $region9: #{tpu_custom_call.1} parent=1 // pred_fallthru
      _
    // Predicated region
    $region10: #{tpu_custom_call.1} parent=1 // pred_check
      _
    $region11: #{tpu_custom_call.1} parent=1 // pred_check_branch
      %25 = sbr.rel (0) target = $region13
    $region12: #{tpu_custom_call.1} parent=1 // pred_region
      _
    $region13: #{tpu_custom_call.1} parent=1 // pred_fallthru
      _
    // Predicated region
    $region14: #{tpu_custom_call.1} parent=1 // pred_check
      _
    $region15: #{tpu_custom_call.1} parent=1 // pred_check_branch
      %27 = sbr.rel (0) target = $region17
    $region16: #{tpu_custom_call.1} parent=1 // pred_region
      %28 = dma.done [#allocation4], 128
    $region17: #{tpu_custom_call.1} parent=1 // pred_fallthru
      _
    %p30 = scmp.eq.s32.totalorder 0, 0
    // Predicated region
    $region18: #{tpu_custom_call.1} parent=1 // pred_check
      %p31 = pneg %p30
    $region19: #{tpu_custom_call.1} parent=1 // pred_check_branch
      %33 = sbr.rel (%p31) target = $region21
    $region20: #{tpu_custom_call.1} parent=1 // pred_region
      %34 = vst [vmem:[#allocation2] sm:$0xff] 0.0
      %35 = vst [vmem:[#allocation2 + $0x8] sm:$0xff] 0.0
    $region21: #{tpu_custom_call.1} parent=1 // pred_fallthru
      _
    %v36 = vld [vmem:[#allocation2] sm:$0xff]
    %v37 = vld [vmem:[#allocation2 + $0x8] sm:$0xff]
    %v38 = vld [vmem:[#allocation3] sm:$0xf]
    %v39 = vld [vmem:[#allocation3 + $0x4] sm:$0xf]
    %v40 = vld [vmem:[%s2] sm:$0xf]
    %v41 = vld [vmem:[%s2 + $0x4] sm:$0xf]
    %v42 = vld [vmem:[%s2 + $0x8] sm:$0xf]
    %v43 = vld [vmem:[%s2 + $0xc] sm:$0xf]
    %v46 = vunpack.c.l.b16 %v38
    %v47 = vunpack.c.l.b16 %v39
    %v48 = vpack.c.b16 %v47, %v46
    %v53 = vunpack.c.l.b16 %v40
    %v54 = vunpack.c.l.b16 %v41
    %v55 = vunpack.c.l.b16 %v42
    %v56 = vunpack.c.l.b16 %v43
    %v57 = vpack.c.b16 %v54, %v53
    %v58 = vpack.c.b16 %v56, %v55
    %vm61 = vcmask 261120
    %v63 = vsel %vm61, %v48, 0
    %65 = vmatprep.subr.bf16.mxu0 0
    %66 = vmatpush1.bf16.msra.mxu0 0
    %67 = vmatprep.subr.bf16.mxu0 0
    %68 = vmatpush1.bf16.msra.mxu0 0
    %69 = vmatprep.subr.bf16.mxu0 0
    %70 = vmatpush1.bf16.msra.mxu0 0
    %71 = vmatprep.subr.bf16.mxu0 0
    %72 = vmatpush1.bf16.msra.mxu0 0
    %73 = vmatprep.subr.bf16.mxu0 0
    %74 = vmatpush1.bf16.msra.mxu0 0
    %75 = vmatprep.subr.bf16.mxu0 0
    %76 = vmatpush1.bf16.msra.mxu0 0
    %77 = vmatprep.subr.bf16.mxu0 0
    %78 = vmatpush1.bf16.msra.mxu0 %v58
    %79 = vmatprep.subr.bf16.mxu0 0
    %80 = vmatpush1.bf16.msra.mxu0 %v57
    %81 = vmatprep.subr.bf16.mxu0 0
    %82 = vmatpush2.bf16.msra.mxu0 0
    %83 = vmatprep.subr.bf16.mxu0 0
    %84 = vmatpush2.bf16.msra.mxu0 0
    %85 = vmatprep.subr.bf16.mxu0 0
    %86 = vmatpush2.bf16.msra.mxu0 0
    %87 = vmatprep.subr.bf16.mxu0 0
    %88 = vmatpush2.bf16.msra.mxu0 0
    %89 = vmatprep.subr.bf16.mxu0 0
    %90 = vmatpush2.bf16.msra.mxu0 0
    %91 = vmatprep.subr.bf16.mxu0 0
    %92 = vmatpush2.bf16.msra.mxu0 0
    %93 = vmatprep.subr.bf16.mxu0 0
    %94 = vmatpush2.bf16.msra.mxu0 0
    %95 = vmatprep.subr.bf16.mxu0 0
    %96 = vmatpush2.bf16.msra.mxu0 0
    %97 = vmatprep.mubr.bf16.mxu0 0
    %98 = vmatmul.mubr.bf16.gmra.mxu0 %v63
    %v99 = vpop.f32.mrf.mxu0
    %v100 = vadd.f32 0.0, %v99
    %v101 = vpop.f32.mrf.mxu0
    %v102 = vpop.f32.mrf.mxu0
    %v103 = vadd.f32 0.0, %v102
    %v104 = vpop.f32.mrf.mxu0
    %105 = vdwg.mxu0
    %v106 = vadd.f32 %v36, %v100
    %v107 = vadd.f32 %v37, %v103
    %108 = vst [vmem:[#allocation2] sm:$0xff] %v106
    %109 = vst [vmem:[#allocation2 + $0x8] sm:$0xff] %v107
    // Predicated region
    $region22: #{tpu_custom_call.1} parent=1 // pred_check
      %p110 = pneg %p30
    $region23: #{tpu_custom_call.1} parent=1 // pred_check_branch
      %112 = sbr.rel (%p110) target = $region25
    $region24: #{tpu_custom_call.1} parent=1 // pred_region
      %s113 = smul.u32 0, 128
      %v114 = vlaneseq
      %v115 = vand.u32 %v114, 127
      %v116 = vstv %s113
      %v117 = vadd.s32 %v116, %v115
      %v118 = vld [vmem:[%s0] sm:$0xff]
      %v119 = vld [vmem:[%s0 + $0x8] sm:$0xff]
      %120 = vset.pattern.permute.xlu0 0
      %121 = vperm.xlu0 %120, %v118
      %v122 = vpop.permute.xlu0 %121
      %123 = vset.pattern.permute.xlu0 0
      %124 = vperm.xlu0 %123, %v119
      %v125 = vpop.permute.xlu0 %124
      %vm126 = vcmp.eq.s32.totalorder %v117, %v122
      %vm127 = vcmp.eq.s32.totalorder %v117, %v125
      %v128 = vld [vmem:[#allocation2] sm:$0xff]
      %v129 = vld [vmem:[#allocation2 + $0x8] sm:$0xff]
      %v130 = vsub.f32 %v128, 22.4
      %v131 = vsub.f32 %v129, 22.4
      %v132 = vsel %vm126, %v130, %v128
      %v133 = vsel %vm127, %v131, %v129
      %134 = vst [vmem:[#allocation6] sm:$0xff] %v132
      %135 = vst [vmem:[#allocation6 + $0x8] sm:$0xff] %v133
    $region25: #{tpu_custom_call.1} parent=1 // pred_fallthru
      _
    // Predicated region
    $region26: #{tpu_custom_call.1} parent=1 // pred_check
      _
    $region27: #{tpu_custom_call.1} parent=1 // pred_check_branch
      %137 = sbr.rel (0) target = $region29
    $region28: #{tpu_custom_call.1} parent=1 // pred_region
      %s139 = ssub.s32 256, 256
      %140 = vsyncadd [#allocation5], %s139
      %s141 = sshll.u32 [#allocation6], 4
      %s142 = int_to_ptr.vmem [resolvable:$true] %s141
      %147 = dma.vmem_to_hbm [thread:$0]  %s142, 256, %s3, [#allocation5], 128, 128, 8
    $region29: #{tpu_custom_call.1} parent=1 // pred_fallthru
      _
    // Predicated region
    $region30: #{tpu_custom_call.1} parent=1 // pred_check
      _
    $region31: #{tpu_custom_call.1} parent=1 // pred_check_branch
      %149 = sbr.rel (0) target = $region33
    $region32: #{tpu_custom_call.1} parent=1 // pred_region
      %150 = dma.done [#allocation5], 256
    $region33: #{tpu_custom_call.1} parent=1 // pred_fallthru
      _
    %151 = vsyncpa [#allocation4], 1
    %152 = vsyncpa [#allocation5], 1

</llo_original>
